<compile_context>
chip_gen: v6e
topology: v6e:2x2x1
jax: 0.10.0
libtpu: 0.0.40
codegen_flags: <defaults>
</compile_context>

<pallas_src>
import numpy as np
import jax
import jax.numpy as jnp
from jax.experimental import pallas as pl
from jax.experimental.pallas import tpu as pltpu

try:  # optional; pure-Python fallback below keeps the script self-contained
    from scipy.optimize import linear_sum_assignment as _scipy_lsa
except Exception:  # pragma: no cover
    _scipy_lsa = None


def _pick_batch_block(bs, cap=16):
    """Largest divisor of bs that is <= cap (so grid = bs // Bb is exact)."""
    for b in range(min(bs, cap), 0, -1):
        if bs % b == 0:
            return b
    return 1


# --------------------------------------------------------------------------
# Kernel 1: masked pairwise squared-error matrices, Bb batches per grid step.
#   pd[b,t,n]       = mean_f (target[b,t,f]-input[b,n,f])^2 * pf_mask[b,n]
#                     (then nan_to_num)
#   P[b,0/1/2/3]    = pd, pt, eta, phi   (per-feature sq errors, f = 0,1,2)
# Input is fed pre-transposed as [bs, F, N] so all broadcasts keep N on the
# lane axis and T on sublanes (no in-kernel transposes).
# --------------------------------------------------------------------------
def pdist_kernel(xT_ref, t_ref, m_ref, pd_ref, p_ref):
    xT = xT_ref[...]            # [Bb, F, N]
    t = t_ref[...]              # [Bb, T, F]
    mask = m_ref[...]           # [Bb, 1, N]

    Bb, F, N = xT.shape
    T = t.shape[1]

    acc = jnp.zeros((Bb, T, N), jnp.float32)
    sq_keep = [None, None, None]            # only pt/eta/phi tiles stay live
    for f in range(F):                      # static unroll over features
        d = t[:, :, f:f + 1] - xT[:, f:f + 1, :]   # [Bb,T,1]-[Bb,1,N]->[Bb,T,N]
        sq = d * d
        acc = acc + sq
        if f < 3:
            sq_keep[f] = sq

    pd = jnp.nan_to_num(acc * (1.0 / F) * mask, nan=0.0, posinf=0.0, neginf=0.0)

    pd_ref[...] = pd
    p_ref[...] = jnp.stack(
        [pd, sq_keep[0] * mask, sq_keep[1] * mask, sq_keep[2] * mask], axis=1)


def compute_pdist(inp, target, pf_mask, batch_block=None):
    bs, N, F = inp.shape
    T = target.shape[1]
    assert F >= 3, "Set2SetLoss needs at least 3 features (pt, eta, phi)"
    Bb = batch_block or _pick_batch_block(bs)

    xT = jnp.transpose(inp, (0, 2, 1)).astype(jnp.float32)      # [bs, F, N]
    tgt = target.astype(jnp.float32)                            # [bs, T, F]
    m3 = pf_mask.astype(jnp.float32).reshape(bs, 1, N)          # [bs, 1, N]

    return pl.pallas_call(
        pdist_kernel,
        out_shape=(jax.ShapeDtypeStruct((bs, T, N), jnp.float32),
                   jax.ShapeDtypeStruct((bs, 4, T, N), jnp.float32)),
        grid=(bs // Bb,),
        in_specs=[
            pl.BlockSpec((Bb, F, N), lambda b: (b, 0, 0)),
            pl.BlockSpec((Bb, T, F), lambda b: (b, 0, 0)),
            pl.BlockSpec((Bb, 1, N), lambda b: (b, 0, 0)),
        ],
        out_specs=(
            pl.BlockSpec((Bb, T, N), lambda b: (b, 0, 0)),
            pl.BlockSpec((Bb, 4, T, N), lambda b: (b, 0, 0, 0)),
        ),
        compiler_params=pltpu.CompilerParams(dimension_semantics=("parallel",)),
    )(xT, tgt, m3)


# --------------------------------------------------------------------------
# Kernel 2: gather the Hungarian-assigned entries and average per batch.
# Indicator-mask formulation (VPU compares + XLU reduce); no MXU one-hot.
#   flat indices come from the host, bug-compatibly computed as K*r + c
#   (matching the reference's `indices.shape[2] * r + c`) and are matched
#   against the true row-major flat index t*N + n of the [T, N] matrix,
#   exactly like torch.gather on pdist.flatten(0, 1).
# --------------------------------------------------------------------------
def assign_kernel(idx_ref, p_ref, out_ref):
    idx = idx_ref[0]                  # [Bb, K] int32
    P = p_ref[...]                    # [Bb, 4, T, N] f32
    Bb, C, T, N = P.shape
    K = idx.shape[-1]

    row = jax.lax.broadcasted_iota(jnp.int32, (T, N), 0)
    col = jax.lax.broadcasted_iota(jnp.int32, (T, N), 1)
    flat2d = row * N + col            # row-major flat index of the [T, N] matrix

    ind = jnp.zeros((Bb, T, N), jnp.float32)
    for k in range(K):                # K = min(T, N): short static unroll
        sel = idx[:, k:k + 1][:, :, None]                     # [Bb, 1, 1]
        ind = ind + (flat2d[None, :, :] == sel).astype(jnp.float32)

    picked = P * ind[:, None, :, :]                           # [Bb, 4, T, N]
    out_ref[0] = jnp.sum(picked, axis=(2, 3)) * (1.0 / K)     # [Bb, 4]


def gather_assigned(P, flat_idx, batch_block=None):
    bs, C, T, N = P.shape
    K = flat_idx.shape[-1]
    Bb = batch_block or _pick_batch_block(bs)
    NB = bs // Bb
    idx3 = flat_idx.astype(jnp.int32).reshape(NB, Bb, K)

    out = pl.pallas_call(
        assign_kernel,
        out_shape=jax.ShapeDtypeStruct((NB, Bb, C), jnp.float32),
        grid=(NB,),
        in_specs=[
            pl.BlockSpec((1, Bb, K), lambda b: (b, 0, 0)),
            pl.BlockSpec((Bb, C, T, N), lambda b: (b, 0, 0, 0)),
        ],
        out_specs=pl.BlockSpec((1, Bb, C), lambda b: (b, 0, 0)),
        compiler_params=pltpu.CompilerParams(dimension_semantics=("parallel",)),
    )(idx3, P)
    return out.reshape(bs, C)


# --------------------------------------------------------------------------
# Host-side Hungarian assignment.
# TODO(synk): linear_sum_assignment has no Pallas equivalent; it runs on host
# (scipy when available, pure-Python O(n^3) fallback otherwise).
# --------------------------------------------------------------------------
def _hungarian_py(cost):
    cost = np.asarray(cost, dtype=np.float64)
    n, m = cost.shape
    transposed = False
    if n > m:
        cost = cost.T
        n, m = m, n
        transposed = True
    INF = float("inf")
    u = [0.0] * (n + 1)
    v = [0.0] * (m + 1)
    p = [0] * (m + 1)
    way = [0] * (m + 1)
    for i in range(1, n + 1):
        p[0] = i
        j0 = 0
        minv = [INF] * (m + 1)
        used = [False] * (m + 1)
        while True:
            used[j0] = True
            i0 = p[j0]
            delta = INF
            j1 = 0
            for j in range(1, m + 1):
                if not used[j]:
                    cur = cost[i0 - 1][j - 1] - u[i0] - v[j]
                    if cur < minv[j]:
                        minv[j] = cur
                        way[j] = j0
                    if minv[j] < delta:
                        delta = minv[j]
                        j1 = j
            for j in range(m + 1):
                if used[j]:
                    u[p[j]] += delta
                    v[j] -= delta
                else:
                    minv[j] -= delta
            j0 = j1
            if p[j0] == 0:
                break
        while True:
            j1 = way[j0]
            p[j0] = p[j1]
            j0 = j1
            if j0 == 0:
                break
    col_of_row = [0] * n
    for j in range(1, m + 1):
        if p[j] != 0:
            col_of_row[p[j] - 1] = j - 1
    row_ind = np.arange(n)
    col_ind = np.array(col_of_row)
    if transposed:
        row_ind, col_ind = col_ind, row_ind
        order = np.argsort(row_ind)
        row_ind, col_ind = row_ind[order], col_ind[order]
    return row_ind, col_ind


def _assign(cost):
    if _scipy_lsa is not None:
        r, c = _scipy_lsa(np.asarray(cost))
        return np.asarray(r), np.asarray(c)
    return _hungarian_py(cost)


# --------------------------------------------------------------------------
# Full Set2SetLoss forward
# --------------------------------------------------------------------------
def set2set_loss(inp, target, mask):
    bs, N, _ = inp.shape
    T = target.shape[1]
    pf_mask = mask[..., 1]

    pd, P = compute_pdist(inp, target, pf_mask)

    # Only pd leaves the device; D2H starts right after kernel 1.
    pd_np = np.asarray(jax.device_get(pd))

    K = min(T, N)
    flat_idx = np.empty((bs, K), dtype=np.int32)
    for b in range(bs):
        r, c = _assign(pd_np[b])
        # bug-compatible with the reference: stride = number of assignments
        # (= min(T, N)), not the true row stride N of the flattened matrix.
        flat_idx[b] = (len(r) * np.asarray(r) + np.asarray(c)).astype(np.int32)

    per_batch = gather_assigned(P, jnp.asarray(flat_idx))      # [bs, 4]
    losses = jnp.mean(per_batch, axis=0)                       # [4]
    return {
        "total_loss": losses[0],
        "pt_loss": losses[1],
        "eta_loss": losses[2],
        "phi_loss": losses[3],
    }


# --------------------------------------------------------------------------
# Pure-numpy reference (mirrors the PyTorch module)
# --------------------------------------------------------------------------
def reference(inp, target, mask):
    inp = np.asarray(inp, np.float64)
    target = np.asarray(target, np.float64)
    mask = np.asarray(mask, np.float64)
    bs, N, F = inp.shape
    T = target.shape[1]
    new_mask = mask[..., 1][:, None, :]
    sq = (target[:, :, None, :] - inp[:, None, :, :]) ** 2
    pd = np.nan_to_num(sq.mean(-1) * new_mask, nan=0.0, posinf=0.0, neginf=0.0)
    pt, eta, phi = (sq[..., i] * new_mask for i in range(3))
    tot = np.zeros(bs); tp = np.zeros(bs); te = np.zeros(bs); tph = np.zeros(bs)
    for b in range(bs):
        r, c = _assign(pd[b])
        flat = len(r) * np.asarray(r) + np.asarray(c)
        tot[b] = pd[b].reshape(-1)[flat].mean()
        tp[b] = pt[b].reshape(-1)[flat].mean()
        te[b] = eta[b].reshape(-1)[flat].mean()
        tph[b] = phi[b].reshape(-1)[flat].mean()
    return {"total_loss": tot.mean(), "pt_loss": tp.mean(),
            "eta_loss": te.mean(), "phi_loss": tph.mean()}


if __name__ == "__main__":
    bs, N, T, F = 2, 8, 8, 4
    key = jax.random.PRNGKey(0)
    k1, k2, k3 = jax.random.split(key, 3)

    inp = jax.random.normal(k1, (bs, N, F), dtype=jnp.float32)
    target = jax.random.normal(k2, (bs, T, F), dtype=jnp.float32)
    mask_ch1 = (jax.random.uniform(k3, (bs, N)) > 0.3).astype(jnp.float32)
    mask = jnp.stack([jnp.ones((bs, N), jnp.float32), mask_ch1], axis=-1)  # [bs, N, 2]

    out = set2set_loss(inp, target, mask)
    out = {k: jax.block_until_ready(v) for k, v in out.items()}

    ref = reference(np.asarray(inp), np.asarray(target), np.asarray(mask))
    for k in out:
        np.testing.assert_allclose(np.asarray(out[k]), ref[k], rtol=1e-4, atol=1e-5)

    print("KERNEL_OK")
</pallas_src>

<mosaic_0001>
module attributes {stable_mosaic.version = 11 : i64} {
  func.func @pdist_kernel(%arg0: i32, %arg1: memref<2x4x8xf32, #tpu.memory_space<vmem>>, %arg2: memref<2x8x4xf32, #tpu.memory_space<vmem>>, %arg3: memref<2x1x8xf32, #tpu.memory_space<vmem>>, %arg4: memref<2x8x8xf32, #tpu.memory_space<vmem>>, %arg5: memref<2x4x8x8xf32, #tpu.memory_space<vmem>>) attributes {dimension_semantics = [#tpu.dimension_semantics<parallel>], iteration_bounds = array<i64: 1>, scalar_prefetch = 0 : i64, scratch_operands = 0 : i64, tpu.core_type = #tpu.core_type<tc>, window_params = [{transform_indices = @transform_0, window_bounds = array<i64: 2, 4, 8>}, {transform_indices = @transform_1, window_bounds = array<i64: 2, 8, 4>}, {transform_indices = @transform_2, window_bounds = array<i64: 2, 1, 8>}, {transform_indices = @transform_3, window_bounds = array<i64: 2, 8, 8>}, {transform_indices = @transform_4, window_bounds = array<i64: 2, 4, 8, 8>}]} {
    %c0 = arith.constant 0 : index
    %c0_0 = arith.constant 0 : index
    %c0_1 = arith.constant 0 : index
    %0 = vector.load %arg1[%c0, %c0_0, %c0_1] : memref<2x4x8xf32, #tpu.memory_space<vmem>>, vector<2x4x8xf32>
    %c0_2 = arith.constant 0 : index
    %c0_3 = arith.constant 0 : index
    %c0_4 = arith.constant 0 : index
    %1 = vector.load %arg2[%c0_2, %c0_3, %c0_4] : memref<2x8x4xf32, #tpu.memory_space<vmem>>, vector<2x8x4xf32>
    %c0_5 = arith.constant 0 : index
    %c0_6 = arith.constant 0 : index
    %c0_7 = arith.constant 0 : index
    %2 = vector.load %arg3[%c0_5, %c0_6, %c0_7] : memref<2x1x8xf32, #tpu.memory_space<vmem>>, vector<2x1x8xf32>
    %cst = arith.constant 0.000000e+00 : f32
    %3 = vector.broadcast %cst : f32 to vector<2x8x8xf32>
    %4 = vector.extract_strided_slice %1 {offsets = [0, 0, 0], sizes = [2, 8, 1], strides = [1, 1, 1]} : vector<2x8x4xf32> to vector<2x8x1xf32>
    %5 = vector.extract_strided_slice %0 {offsets = [0, 0, 0], sizes = [2, 1, 8], strides = [1, 1, 1]} : vector<2x4x8xf32> to vector<2x1x8xf32>
    %6 = vector.broadcast %4 : vector<2x8x1xf32> to vector<2x8x8xf32>
    %7 = vector.broadcast %5 : vector<2x1x8xf32> to vector<2x8x8xf32>
    %8 = arith.subf %6, %7 : vector<2x8x8xf32>
    %9 = arith.mulf %8, %8 : vector<2x8x8xf32>
    %10 = arith.addf %3, %9 : vector<2x8x8xf32>
    %11 = vector.extract_strided_slice %1 {offsets = [0, 0, 1], sizes = [2, 8, 1], strides = [1, 1, 1]} : vector<2x8x4xf32> to vector<2x8x1xf32>
    %12 = vector.extract_strided_slice %0 {offsets = [0, 1, 0], sizes = [2, 1, 8], strides = [1, 1, 1]} : vector<2x4x8xf32> to vector<2x1x8xf32>
    %13 = vector.broadcast %11 : vector<2x8x1xf32> to vector<2x8x8xf32>
    %14 = vector.broadcast %12 : vector<2x1x8xf32> to vector<2x8x8xf32>
    %15 = arith.subf %13, %14 : vector<2x8x8xf32>
    %16 = arith.mulf %15, %15 : vector<2x8x8xf32>
    %17 = arith.addf %10, %16 : vector<2x8x8xf32>
    %18 = vector.extract_strided_slice %1 {offsets = [0, 0, 2], sizes = [2, 8, 1], strides = [1, 1, 1]} : vector<2x8x4xf32> to vector<2x8x1xf32>
    %19 = vector.extract_strided_slice %0 {offsets = [0, 2, 0], sizes = [2, 1, 8], strides = [1, 1, 1]} : vector<2x4x8xf32> to vector<2x1x8xf32>
    %20 = vector.broadcast %18 : vector<2x8x1xf32> to vector<2x8x8xf32>
    %21 = vector.broadcast %19 : vector<2x1x8xf32> to vector<2x8x8xf32>
    %22 = arith.subf %20, %21 : vector<2x8x8xf32>
    %23 = arith.mulf %22, %22 : vector<2x8x8xf32>
    %24 = arith.addf %17, %23 : vector<2x8x8xf32>
    %25 = vector.extract_strided_slice %1 {offsets = [0, 0, 3], sizes = [2, 8, 1], strides = [1, 1, 1]} : vector<2x8x4xf32> to vector<2x8x1xf32>
    %26 = vector.extract_strided_slice %0 {offsets = [0, 3, 0], sizes = [2, 1, 8], strides = [1, 1, 1]} : vector<2x4x8xf32> to vector<2x1x8xf32>
    %27 = vector.broadcast %25 : vector<2x8x1xf32> to vector<2x8x8xf32>
    %28 = vector.broadcast %26 : vector<2x1x8xf32> to vector<2x8x8xf32>
    %29 = arith.subf %27, %28 : vector<2x8x8xf32>
    %30 = arith.mulf %29, %29 : vector<2x8x8xf32>
    %31 = arith.addf %24, %30 : vector<2x8x8xf32>
    %cst_8 = arith.constant 2.500000e-01 : f32
    %32 = vector.broadcast %cst_8 : f32 to vector<2x8x8xf32>
    %33 = arith.mulf %31, %32 : vector<2x8x8xf32>
    %34 = vector.broadcast %2 : vector<2x1x8xf32> to vector<2x8x8xf32>
    %35 = arith.mulf %33, %34 : vector<2x8x8xf32>
    %cst_9 = arith.constant 0.000000e+00 : f32
    %cst_10 = arith.constant 0.000000e+00 : f32
    %cst_11 = arith.constant 0.000000e+00 : f32
    %36 = arith.cmpf one, %35, %35 : vector<2x8x8xf32>
    %37 = vector.broadcast %cst_9 : f32 to vector<2x8x8xf32>
    %38 = arith.select %36, %37, %35 : vector<2x8x8xi1>, vector<2x8x8xf32>
    %cst_12 = arith.constant 0x7F800000 : f32
    %39 = vector.broadcast %cst_12 : f32 to vector<2x8x8xf32>
    %40 = arith.cmpf oeq, %38, %39 : vector<2x8x8xf32>
    %41 = vector.broadcast %cst_11 : f32 to vector<2x8x8xf32>
    %42 = arith.select %40, %41, %38 : vector<2x8x8xi1>, vector<2x8x8xf32>
    %cst_13 = arith.constant 0xFF800000 : f32
    %43 = vector.broadcast %cst_13 : f32 to vector<2x8x8xf32>
    %44 = arith.cmpf oeq, %42, %43 : vector<2x8x8xf32>
    %45 = vector.broadcast %cst_10 : f32 to vector<2x8x8xf32>
    %46 = arith.select %44, %45, %42 : vector<2x8x8xi1>, vector<2x8x8xf32>
    %c0_14 = arith.constant 0 : index
    %c0_15 = arith.constant 0 : index
    %c0_16 = arith.constant 0 : index
    %47 = vector.load %arg4[%c0_14, %c0_15, %c0_16] : memref<2x8x8xf32, #tpu.memory_space<vmem>>, vector<2x8x8xf32>
    tpu.vector_store %arg4[%c0_14, %c0_15, %c0_16], %46 {strides = array<i32>} : memref<2x8x8xf32, #tpu.memory_space<vmem>>, vector<2x8x8xf32>,
    %48 = vector.broadcast %2 : vector<2x1x8xf32> to vector<2x8x8xf32>
    %49 = arith.mulf %9, %48 : vector<2x8x8xf32>
    %50 = vector.broadcast %2 : vector<2x1x8xf32> to vector<2x8x8xf32>
    %51 = arith.mulf %16, %50 : vector<2x8x8xf32>
    %52 = vector.broadcast %2 : vector<2x1x8xf32> to vector<2x8x8xf32>
    %53 = arith.mulf %23, %52 : vector<2x8x8xf32>
    %54 = vector.shape_cast %46 : vector<2x8x8xf32> to vector<2x1x8x8xf32>
    %55 = vector.shape_cast %49 : vector<2x8x8xf32> to vector<2x1x8x8xf32>
    %56 = vector.shape_cast %51 : vector<2x8x8xf32> to vector<2x1x8x8xf32>
    %57 = vector.shape_cast %53 : vector<2x8x8xf32> to vector<2x1x8x8xf32>
    %58 = tpu.concatenate %54, %55, %56, %57 in 1 : vector<2x1x8x8xf32>, vector<2x1x8x8xf32>, vector<2x1x8x8xf32>, vector<2x1x8x8xf32> -> vector<2x4x8x8xf32>
    %c0_17 = arith.constant 0 : index
    %c0_18 = arith.constant 0 : index
    %c0_19 = arith.constant 0 : index
    %c0_20 = arith.constant 0 : index
    %59 = vector.load %arg5[%c0_17, %c0_18, %c0_19, %c0_20] : memref<2x4x8x8xf32, #tpu.memory_space<vmem>>, vector<2x4x8x8xf32>
    tpu.vector_store %arg5[%c0_17, %c0_18, %c0_19, %c0_20], %58 {strides = array<i32>} : memref<2x4x8x8xf32, #tpu.memory_space<vmem>>, vector<2x4x8x8xf32>,
    return
  }
  func.func @transform_0(%arg0: i32) -> (i32, i32, i32) {
    %c0_i32 = arith.constant 0 : i32
    %c0_i32_0 = arith.constant 0 : i32
    %c0_i32_1 = arith.constant 0 : i32
    return %arg0, %c0_i32, %c0_i32_0 : i32, i32, i32
  }
  func.func @transform_1(%arg0: i32) -> (i32, i32, i32) {
    %c0_i32 = arith.constant 0 : i32
    %c0_i32_0 = arith.constant 0 : i32
    %c0_i32_1 = arith.constant 0 : i32
    return %arg0, %c0_i32, %c0_i32_0 : i32, i32, i32
  }
  func.func @transform_2(%arg0: i32) -> (i32, i32, i32) {
    %c0_i32 = arith.constant 0 : i32
    %c0_i32_0 = arith.constant 0 : i32
    %c0_i32_1 = arith.constant 0 : i32
    return %arg0, %c0_i32, %c0_i32_0 : i32, i32, i32
  }
  func.func @transform_3(%arg0: i32) -> (i32, i32, i32) {
    %c0_i32 = arith.constant 0 : i32
    %c0_i32_0 = arith.constant 0 : i32
    %c0_i32_1 = arith.constant 0 : i32
    return %arg0, %c0_i32, %c0_i32_0 : i32, i32, i32
  }
  func.func @transform_4(%arg0: i32) -> (i32, i32, i32, i32) {
    %c0_i32 = arith.constant 0 : i32
    %c0_i32_0 = arith.constant 0 : i32
    %c0_i32_1 = arith.constant 0 : i32
    %c0_i32_2 = arith.constant 0 : i32
    return %arg0, %c0_i32, %c0_i32_0, %c0_i32_1 : i32, i32, i32, i32
  }
}

</mosaic_0001>

<llo_original>
// kernel: tpu_custom_call.1
$region0: #{tpu_custom_call.1}
  #allocation0 [shape = 'u32[]', space=smem, size = 0x4, offset = 0x4, fixed_abs, tag = 'smem constant byte address 0x4 - core index']
  #allocation1 [shape = 'u32[144,128]{1,0:T(1,128)}', space=vmem, size = 0x12000, scoped, tag = 'internal scratch']
  %s0 = inlined_call_operand.vmem [shape: f32[2,4,8], index: 0, kind: input, shape index: {}]
  %s1 = inlined_call_operand.vmem [shape: f32[2,8,4], index: 1, kind: input, shape index: {}]
  %s2 = inlined_call_operand.vmem [shape: f32[2,1,8], index: 2, kind: input, shape index: {}]
  %s3 = inlined_call_operand.hbm [shape: f32[2,8,8], index: 3, kind: output, shape index: {0}]
  %s4 = inlined_call_operand.hbm [shape: f32[2,4,8,8], index: 4, kind: output, shape index: {1}]
  %5 = xla_tuple %s3, %s4
  %s6 = sld [smem:[#allocation0]]
  $region30: #{tpu_custom_call.1} parent=0
    _
  %s8 = ssub.s32 1, %s6
  %s9 = scalar_select 0, %s8, %s6
  $region1: #{tpu_custom_call.1} parent=0
    #allocation2 [shape = 'u8[8192]{0}', space=vmem, size = 0x2000, scoped, tag = 'output window, operand 0, single buffered']
    #allocation3 [shape = 's32[1]{0}', space=sflag, size = 0x4, scoped, tag = 'scoped memory for tpu_custom_call.1']
    #allocation4 [shape = 'u8[32768]{0}', space=vmem, size = 0x8000, scoped, tag = 'output window, operand 1, single buffered']
    #allocation5 [shape = 's32[1]{0}', space=sflag, size = 0x4, scoped, tag = 'scoped memory for tpu_custom_call.1']
    %10 = vsyncpa [#allocation3], 0
    %11 = vsyncpa [#allocation5], 0
    // Predicated region
    $region2: #{tpu_custom_call.1} parent=1 // pred_check
      _
    $region3: #{tpu_custom_call.1} parent=1 // pred_check_branch
      %13 = sbr.rel (0) target = $region5
    $region4: #{tpu_custom_call.1} parent=1 // pred_region
      _
    $region5: #{tpu_custom_call.1} parent=1 // pred_fallthru
      _
    // Predicated region
    $region6: #{tpu_custom_call.1} parent=1 // pred_check
      _
    $region7: #{tpu_custom_call.1} parent=1 // pred_check_branch
      %15 = sbr.rel (0) target = $region9
    $region8: #{tpu_custom_call.1} parent=1 // pred_region
      _
    $region9: #{tpu_custom_call.1} parent=1 // pred_fallthru
      _
    // Predicated region
    $region10: #{tpu_custom_call.1} parent=1 // pred_check
      _
    $region11: #{tpu_custom_call.1} parent=1 // pred_check_branch
      %17 = sbr.rel (0) target = $region13
    $region12: #{tpu_custom_call.1} parent=1 // pred_region
      _
    $region13: #{tpu_custom_call.1} parent=1 // pred_fallthru
      _
    %v18 = vld [vmem:[%s0] sm:$0xf]
    %v19 = vld [vmem:[%s0 + $0x4] sm:$0xf]
    %v20 = vld [vmem:[%s1] sm:$0xff]
    %v21 = vld [vmem:[%s1 + $0x8] sm:$0xff]
    %v22 = vld [vmem:[%s2] sm:$0x1]
    %v23 = vld [vmem:[%s2 + $0x1] sm:$0x1]
    %25 = vset.pattern.permute.xlu0 0
    %26 = vperm.xlu0 %25, %v20
    %v27 = vpop.permute.xlu0 %26
    %30 = vset.pattern.permute.xlu0 0
    %31 = vperm.xlu0 %30, %v21
    %v32 = vpop.permute.xlu0 %31
    %v34 = vlaneseq
    %v35 = vshrl.u32 %v34, 7
    %v36 = vsub.s32 0, %v35
    %v37 = vrot.slane %v18, %v36
    %v38 = vlaneseq
    %v39 = vshrl.u32 %v38, 7
    %v40 = vsub.s32 0, %v39
    %v41 = vrot.slane %v19, %v40
    %v42 = vsub.f32 %v27, %v37
    %v43 = vsub.f32 %v32, %v41
    %v44 = vmul.f32 %v42, %v42
    %v45 = vmul.f32 %v43, %v43
    %v46 = vadd.f32 %v44, 0.0
    %v47 = vadd.f32 %v45, 0.0
    %48 = vset.pattern.permute.xlu0 1
    %49 = vperm.xlu0 %48, %v20
    %v50 = vpop.permute.xlu0 %49
    %52 = vset.pattern.permute.xlu0 1
    %53 = vperm.xlu0 %52, %v21
    %v54 = vpop.permute.xlu0 %53
    %v56 = vlaneseq
    %v57 = vshrl.u32 %v56, 7
    %v58 = vsub.s32 1, %v57
    %v59 = vrot.slane %v18, %v58
    %v60 = vlaneseq
    %v61 = vshrl.u32 %v60, 7
    %v62 = vsub.s32 1, %v61
    %v63 = vrot.slane %v19, %v62
    %v64 = vsub.f32 %v50, %v59
    %v65 = vsub.f32 %v54, %v63
    %v66 = vmul.f32 %v64, %v64
    %v67 = vmul.f32 %v65, %v65
    %v68 = vadd.f32 %v46, %v66
    %v69 = vadd.f32 %v47, %v67
    %70 = vset.pattern.permute.xlu0 2
    %71 = vperm.xlu0 %70, %v20
    %v72 = vpop.permute.xlu0 %71
    %74 = vset.pattern.permute.xlu0 2
    %75 = vperm.xlu0 %74, %v21
    %v76 = vpop.permute.xlu0 %75
    %v78 = vlaneseq
    %v79 = vshrl.u32 %v78, 7
    %v80 = vsub.s32 2, %v79
    %v81 = vrot.slane %v18, %v80
    %v82 = vlaneseq
    %v83 = vshrl.u32 %v82, 7
    %v84 = vsub.s32 2, %v83
    %v85 = vrot.slane %v19, %v84
    %v86 = vsub.f32 %v72, %v81
    %v87 = vsub.f32 %v76, %v85
    %v88 = vmul.f32 %v86, %v86
    %v89 = vmul.f32 %v87, %v87
    %v90 = vadd.f32 %v68, %v88
    %v91 = vadd.f32 %v69, %v89
    %92 = vset.pattern.permute.xlu0 3
    %93 = vperm.xlu0 %92, %v20
    %v94 = vpop.permute.xlu0 %93
    %96 = vset.pattern.permute.xlu0 3
    %97 = vperm.xlu0 %96, %v21
    %v98 = vpop.permute.xlu0 %97
    %v100 = vlaneseq
    %v101 = vshrl.u32 %v100, 7
    %v102 = vsub.s32 3, %v101
    %v103 = vrot.slane %v18, %v102
    %v104 = vlaneseq
    %v105 = vshrl.u32 %v104, 7
    %v106 = vsub.s32 3, %v105
    %v107 = vrot.slane %v19, %v106
    %v108 = vsub.f32 %v94, %v103
    %v109 = vsub.f32 %v98, %v107
    %v110 = vmul.f32 %v108, %v108
    %v111 = vmul.f32 %v109, %v109
    %v112 = vadd.f32 %v90, %v110
    %v113 = vadd.f32 %v91, %v111
    %v114 = vmul.f32 %v112, 0.25
    %v115 = vmul.f32 %v113, 0.25
    %v118 = vlaneseq
    %v119 = vshrl.u32 %v118, 7
    %v120 = vsub.s32 0, %v119
    %v121 = vrot.slane %v22, %v120
    %v122 = vlaneseq
    %v123 = vshrl.u32 %v122, 7
    %v124 = vsub.s32 0, %v123
    %v125 = vrot.slane %v23, %v124
    %v128 = vmul.f32 %v114, %v121
    %v129 = vmul.f32 %v115, %v125
    %vm130 = vcmp.ne.f32.partialorder %v128, %v128
    %vm131 = vcmp.ne.f32.partialorder %v129, %v129
    %v132 = vsel %vm130, 0.0, %v128
    %v133 = vsel %vm131, 0.0, %v129
    %vm134 = vcmp.eq.f32.partialorder %v132, inf
    %vm135 = vcmp.eq.f32.partialorder %v133, inf
    %v136 = vsel %vm134, 0.0, %v132
    %v137 = vsel %vm135, 0.0, %v133
    %vm138 = vcmp.eq.f32.partialorder %v136, -inf
    %vm139 = vcmp.eq.f32.partialorder %v137, -inf
    %v140 = vsel %vm138, 0.0, %v136
    %v141 = vsel %vm139, 0.0, %v137
    %vm142 = vcmask 64512
    %143 = vst.msk [vmem:[#allocation2] sm:$0xff] %vm142, %v140
    %144 = vst.msk [vmem:[#allocation2 + $0x8] sm:$0xff] %vm142, %v141
    %v145 = vmul.f32 %v44, %v121
    %v146 = vmul.f32 %v45, %v125
    %v147 = vmul.f32 %v66, %v121
    %v148 = vmul.f32 %v67, %v125
    %v149 = vmul.f32 %v88, %v121
    %v150 = vmul.f32 %v89, %v125
    %151 = vst.msk [vmem:[#allocation4] sm:$0xff] %vm142, %v140
    %152 = vst.msk [vmem:[#allocation4 + $0x8] sm:$0xff] %vm142, %v145
    %153 = vst.msk [vmem:[#allocation4 + $0x10] sm:$0xff] %vm142, %v147
    %154 = vst.msk [vmem:[#allocation4 + $0x18] sm:$0xff] %vm142, %v149
    %155 = vst.msk [vmem:[#allocation4 + $0x20] sm:$0xff] %vm142, %v141
    %156 = vst.msk [vmem:[#allocation4 + $0x28] sm:$0xff] %vm142, %v146
    %157 = vst.msk [vmem:[#allocation4 + $0x30] sm:$0xff] %vm142, %v148
    %158 = vst.msk [vmem:[#allocation4 + $0x38] sm:$0xff] %vm142, %v150
    // Predicated region
    $region14: #{tpu_custom_call.1} parent=1 // pred_check
      _
    $region15: #{tpu_custom_call.1} parent=1 // pred_check_branch
      %160 = sbr.rel (0) target = $region17
    $region16: #{tpu_custom_call.1} parent=1 // pred_region
      %s162 = ssub.s32 256, 256
      %163 = vsyncadd [#allocation3], %s162
      %s164 = sshll.u32 [#allocation2], 4
      %s165 = int_to_ptr.vmem [resolvable:$true] %s164
      %170 = dma.vmem_to_hbm [thread:$0]  %s165, 256, %s3, [#allocation3], 128, 128, 8
    $region17: #{tpu_custom_call.1} parent=1 // pred_fallthru
      _
    // Predicated region
    $region18: #{tpu_custom_call.1} parent=1 // pred_check
      _
    $region19: #{tpu_custom_call.1} parent=1 // pred_check_branch
      %172 = sbr.rel (0) target = $region21
    $region20: #{tpu_custom_call.1} parent=1 // pred_region
      %s174 = ssub.s32 1024, 1024
      %175 = vsyncadd [#allocation5], %s174
      %s176 = sshll.u32 [#allocation4], 4
      %s177 = int_to_ptr.vmem [resolvable:$true] %s176
      %182 = dma.vmem_to_hbm [thread:$0]  %s177, 1024, %s4, [#allocation5], 128, 128, 8
    $region21: #{tpu_custom_call.1} parent=1 // pred_fallthru
      _
    // Predicated region
    $region22: #{tpu_custom_call.1} parent=1 // pred_check
      _
    $region23: #{tpu_custom_call.1} parent=1 // pred_check_branch
      %184 = sbr.rel (0) target = $region25
    $region24: #{tpu_custom_call.1} parent=1 // pred_region
      %185 = dma.done [#allocation3], 256
    $region25: #{tpu_custom_call.1} parent=1 // pred_fallthru
      _
    // Predicated region
    $region26: #{tpu_custom_call.1} parent=1 // pred_check
      _
    $region27: #{tpu_custom_call.1} parent=1 // pred_check_branch
      %187 = sbr.rel (0) target = $region29
    $region28: #{tpu_custom_call.1} parent=1 // pred_region
      %188 = dma.done [#allocation5], 1024
    $region29: #{tpu_custom_call.1} parent=1 // pred_fallthru
      _
    %189 = vsyncpa [#allocation3], 1
    %190 = vsyncpa [#allocation5], 1

</llo_original>
